<compile_context>
chip_gen: v7x
topology: tpu7x:2x2x1
jax: 0.10.0
libtpu: 0.0.40
codegen_flags: <defaults>
</compile_context>

<pallas_src>
import functools
import math

import numpy as np
import jax
import jax.numpy as jnp
from jax.experimental import pallas as pl
from jax.experimental.pallas import tpu as pltpu


# ---------------------------------------------------------------------------
# init-time table (the registered buffer in the PyTorch module)
# ---------------------------------------------------------------------------
def get_fixed_sin_cos_encodings(d_model, max_len):
    """Standard sinusoidal encodings, shape (max_len, d_model), float32."""
    position = np.arange(max_len, dtype=np.float32)[:, None]
    div_term = np.exp(np.arange(0, d_model, 2, dtype=np.float32)
                      * -(math.log(10000.0) / d_model))
    pe = np.zeros((max_len, d_model), dtype=np.float32)
    pe[:, 0::2] = np.sin(position * div_term)
    pe[:, 1::2] = np.cos(position * div_term)
    return jnp.asarray(pe)


# ---------------------------------------------------------------------------
# Pallas kernel: broadcast one lane-dense PE slab tile across the batch block
# ---------------------------------------------------------------------------
def _pe_broadcast_kernel(pe_ref, out_ref):
    # pe_ref : (1, block_n)        lane-dense slice of the flattened PE table
    # out_ref: (block_b, block_n)  pure sublane broadcast + full-width store
    out_ref[...] = jnp.broadcast_to(pe_ref[...], out_ref.shape)


# ---------------------------------------------------------------------------
# blocking heuristics
# ---------------------------------------------------------------------------
_MAX_BLOCK_BYTES = 6 * 1024 * 1024   # output block cap: 2x (double-buffered)
                                     # fits default scoped VMEM on v5e/v6e/v7x
_MIN_SPLIT_BYTES = 256 * 1024        # min bytes per TC half before splitting
_MAX_LANE_TILE = 32 * 1024           # lane-tile upper bound (8K-32K lanes)


def _num_tensorcores():
    """Best-effort TensorCore count of device 0 (1 on v5e/v6e, 2 on v7x)."""
    try:
        dev = jax.devices()[0]
        for attr in ("num_cores", "core_count", "num_tensorcores"):
            n = getattr(dev, attr, None)
            if isinstance(n, int) and n >= 1:
                return n
    except Exception:
        pass
    try:
        info = pltpu.get_tpu_info()
        for attr in ("num_cores", "tensorcore_count", "num_tensorcores"):
            n = getattr(info, attr, None)
            if isinstance(n, int) and n >= 1:
                return n
    except Exception:
        pass
    return 1


def _largest_divisor(total, multiple_of, limit):
    """Largest divisor of `total` that is a multiple of `multiple_of` and <= limit."""
    limit = min(total, limit)
    best = None
    for d in range(multiple_of, limit + 1, multiple_of):
        if total % d == 0:
            best = d
    return best


def _choose_blocks(batch, n_flat, itemsize, num_cores):
    pack = {1: 32, 2: 16, 4: 8}.get(itemsize, 8)   # dtype-aware sublane pack

    # lane (last-dim) block: full row if it fits VMEM budget, else 128-multiple
    if n_flat * itemsize <= _MAX_BLOCK_BYTES or n_flat % 128 != 0:
        block_n = n_flat                            # full dim is always legal
    else:
        lane_limit = min(_MAX_LANE_TILE,
                         max(128, (_MAX_BLOCK_BYTES // itemsize) // 128 * 128))
        block_n = _largest_divisor(n_flat, 128, lane_limit) or n_flat

    row_bytes = block_n * itemsize
    rows_budget = max(1, _MAX_BLOCK_BYTES // row_bytes)

    # batch (sublane) block
    if batch <= rows_budget:
        block_b = batch                             # one step on 1-TC chips
        # split across TensorCores only on 2-TC parts with enough bytes/half
        if (num_cores >= 2 and block_n == n_flat
                and batch % (2 * pack) == 0
                and (batch // 2) * row_bytes >= _MIN_SPLIT_BYTES):
            block_b = batch // 2
    else:
        block_b = (_largest_divisor(batch, pack, rows_budget)
                   or _largest_divisor(batch, 8, rows_budget)
                   or batch)                        # fallback: full dim
    return block_b, block_n


@functools.lru_cache(maxsize=None)
def _build_broadcast_fn(batch, n_flat, dtype_name):
    """Build (once per shape/dtype) the jitted pallas_call for the broadcast."""
    dtype = jnp.dtype(dtype_name)
    itemsize = dtype.itemsize
    num_cores = _num_tensorcores()
    block_b, block_n = _choose_blocks(batch, n_flat, itemsize, num_cores)
    grid = (batch // block_b, n_flat // block_n)

    in_spec_kwargs = {}
    # PE slab block is identical for every batch step: single-buffer it so it
    # is never redundantly re-DMA'd and frees VMEM for larger output blocks.
    if grid[0] > 1 and grid[1] == 1 and hasattr(pl, "Buffered"):
        in_spec_kwargs["pipeline_mode"] = pl.Buffered(1)

    in_spec = pl.BlockSpec((1, block_n), lambda i, j: (0, j), **in_spec_kwargs)
    out_spec = pl.BlockSpec((block_b, block_n), lambda i, j: (i, j))

    compiler_kwargs = dict(dimension_semantics=("parallel", "parallel"))
    est_bytes = 2 * block_b * block_n * itemsize + 2 * block_n * itemsize
    if est_bytes > 16 * 1024 * 1024:   # only raise when we intentionally exceed
        compiler_kwargs["vmem_limit_bytes"] = int(est_bytes * 5 // 4)

    call = pl.pallas_call(
        _pe_broadcast_kernel,
        out_shape=jax.ShapeDtypeStruct((batch, n_flat), dtype),
        grid=grid,
        in_specs=[in_spec],
        out_specs=out_spec,
        compiler_params=pltpu.CompilerParams(**compiler_kwargs),
        cost_estimate=pl.CostEstimate(
            flops=0, transcendentals=0,
            bytes_accessed=(batch * n_flat + n_flat) * itemsize),
    )
    return jax.jit(call)


# ---------------------------------------------------------------------------
# module-like wrapper (caches the lane-dense slab per actual_len at init/first use)
# ---------------------------------------------------------------------------
class AbsoluteTemporalPositionalEncoding:
    def __init__(self, max_len, d_model, trainable=False, *, dtype=jnp.float32,
                 key=None):
        self.max_len = max_len
        self.d_model = d_model
        self.trainable = trainable
        if trainable:
            key = key if key is not None else jax.random.PRNGKey(0)
            # nn.Embedding weight equivalent (N(0,1) init); forward math identical.
            self.pe = jax.random.normal(key, (max_len, d_model), dtype=dtype)
        else:
            self.pe = get_fixed_sin_cos_encodings(d_model, max_len).astype(dtype)
        self._slab_cache = {}   # actual_len -> (1, actual_len*d_model) slab

    def _slab(self, actual_len):
        slab = self._slab_cache.get(actual_len)
        if slab is None:
            # contiguous static slice + flatten, done ONCE per actual_len
            slab = self.pe[:actual_len, :].reshape(1, actual_len * self.d_model)
            self._slab_cache[actual_len] = slab
        return slab

    def __call__(self, x):
        batch, actual_len = x.shape[0], x.shape[1]
        assert actual_len <= self.max_len
        n_flat = actual_len * self.d_model
        slab = self._slab(actual_len)
        fn = _build_broadcast_fn(batch, n_flat, jnp.dtype(self.pe.dtype).name)
        out_flat = fn(slab)
        # contiguous (memory-order preserving) reshape: (B, L*D) -> (B, L, 1, D)
        return out_flat.reshape(batch, actual_len, 1, self.d_model)

    def get_pe(self, position):
        return self.pe[position]


# ---------------------------------------------------------------------------
# plain-JAX reference (mirrors the PyTorch forward exactly)
# ---------------------------------------------------------------------------
def _ref_forward(x, pe_table):
    batch, actual_len = x.shape[0], x.shape[1]
    d_model = pe_table.shape[1]
    return jnp.broadcast_to(pe_table[None, :actual_len, None, :],
                            (batch, actual_len, 1, d_model))


# ---------------------------------------------------------------------------
if __name__ == "__main__":
    max_len, d_model = 16, 32
    batch, actual_len = 2, 8

    module = AbsoluteTemporalPositionalEncoding(max_len, d_model, trainable=False)

    key = jax.random.PRNGKey(0)
    # x: (batch, actual_len, d_model) -- only its shape matters to the forward.
    x = jax.random.normal(key, (batch, actual_len, d_model), dtype=jnp.float32)

    out = module(x)
    jax.block_until_ready(out)
    assert out.shape == (batch, actual_len, 1, d_model)
    np.testing.assert_allclose(np.asarray(out),
                               np.asarray(_ref_forward(x, module.pe)),
                               rtol=1e-6, atol=1e-6)

    # a second shape to exercise the blocking / slab-cache path
    x2 = jax.random.normal(key, (16, max_len, d_model), dtype=jnp.float32)
    out2 = module(x2)
    jax.block_until_ready(out2)
    np.testing.assert_allclose(np.asarray(out2),
                               np.asarray(_ref_forward(x2, module.pe)),
                               rtol=1e-6, atol=1e-6)

    print("KERNEL_OK")
</pallas_src>

<mosaic_0001>
module attributes {stable_mosaic.version = 11 : i64} {
  func.func @_pe_broadcast_kernel(%arg0: i32, %arg1: i32, %arg2: memref<1x256xf32, #tpu.memory_space<vmem>>, %arg3: memref<2x256xf32, #tpu.memory_space<vmem>>) attributes {dimension_semantics = [#tpu.dimension_semantics<parallel>, #tpu.dimension_semantics<parallel>], iteration_bounds = array<i64: 1, 1>, scalar_prefetch = 0 : i64, scratch_operands = 0 : i64, tpu.core_type = #tpu.core_type<tc>, window_params = [{transform_indices = @transform_0, window_bounds = array<i64: 1, 256>}, {transform_indices = @transform_1, window_bounds = array<i64: 2, 256>}]} {
    %c0 = arith.constant 0 : index
    %c0_0 = arith.constant 0 : index
    %0 = vector.load %arg2[%c0, %c0_0] : memref<1x256xf32, #tpu.memory_space<vmem>>, vector<1x256xf32>
    %1 = vector.shape_cast %0 : vector<1x256xf32> to vector<1x256xf32>
    %2 = vector.broadcast %1 : vector<1x256xf32> to vector<2x256xf32>
    %c0_1 = arith.constant 0 : index
    %c0_2 = arith.constant 0 : index
    %3 = vector.load %arg3[%c0_1, %c0_2] : memref<2x256xf32, #tpu.memory_space<vmem>>, vector<2x256xf32>
    tpu.vector_store %arg3[%c0_1, %c0_2], %2 {strides = array<i32>} : memref<2x256xf32, #tpu.memory_space<vmem>>, vector<2x256xf32>,
    return
  }
  func.func @transform_0(%arg0: i32, %arg1: i32) -> (i32, i32) {
    %c0_i32 = arith.constant 0 : i32
    %c0_i32_0 = arith.constant 0 : i32
    return %c0_i32, %arg1 : i32, i32
  }
  func.func @transform_1(%arg0: i32, %arg1: i32) -> (i32, i32) {
    %c0_i32 = arith.constant 0 : i32
    return %arg0, %arg1 : i32, i32
  }
}

</mosaic_0001>

<llo_original>
// kernel: tpu_custom_call.1
$region0: #{tpu_custom_call.1}
  #allocation0 [shape = 'u32[]', space=smem, size = 0x4, offset = 0x4, fixed_abs, tag = 'smem constant byte address 0x4 - core index']
  #allocation1 [shape = 'u32[144,128]{1,0:T(1,128)}', space=vmem, size = 0x12000, scoped, tag = 'internal scratch']
  %s0 = inlined_call_operand.hbm [shape: f32[1,256], index: 0, kind: input, shape index: {}]
  %s1 = inlined_call_operand.hbm [shape: f32[2,256], index: 1, kind: output, shape index: {}]
  %s2 = sld [smem:[#allocation0]]
  $region18: #{tpu_custom_call.1} parent=0
    _
  %s4 = ssub.s32 1, %s2
  %s5 = scalar_select 0, %s4, %s2
  $region1: #{tpu_custom_call.1} parent=0
    #allocation2 [shape = 'u8[1024]{0}', space=vmem, size = 0x400, scoped, tag = 'input window, operand 0, single buffered']
    #allocation3 [shape = 's32[1]{0}', space=sflag, size = 0x4, scoped, tag = 'scoped memory for tpu_custom_call.1']
    #allocation4 [shape = 's32[1]{0}', space=sflag, size = 0x4, scoped, tag = 'scoped memory for tpu_custom_call.1']
    #allocation5 [shape = 'u8[2048]{0}', space=vmem, size = 0x800, scoped, tag = 'output window, operand 0, single buffered']
    %6 = vsyncpa [#allocation3], 0
    %7 = vsyncpa [#allocation4], 0
    // Predicated region
    $region2: #{tpu_custom_call.1} parent=1 // pred_check
      _
    $region3: #{tpu_custom_call.1} parent=1 // pred_check_branch
      %9 = sbr.rel (0) target = $region5
    $region4: #{tpu_custom_call.1} parent=1 // pred_region
      %s11 = ssub.s32 32, 32
      %12 = vsyncadd [#allocation3], %s11
      %s14 = sshll.u32 [#allocation2], 4
      %s15 = int_to_ptr.vmem [resolvable:$true] %s14
      %17 = dma.hbm_to_vmem [thread:$0]  %s0, 32, %s15, [#allocation3]
    $region5: #{tpu_custom_call.1} parent=1 // pred_fallthru
      _
    // Predicated region
    $region6: #{tpu_custom_call.1} parent=1 // pred_check
      _
    $region7: #{tpu_custom_call.1} parent=1 // pred_check_branch
      %19 = sbr.rel (0) target = $region9
    $region8: #{tpu_custom_call.1} parent=1 // pred_region
      %20 = dma.done [#allocation3], 32
    $region9: #{tpu_custom_call.1} parent=1 // pred_fallthru
      _
    %v21 = vld [vmem:[#allocation2] sm:$0x3]
    %v23 = vlaneseq
    %v24 = vshrl.u32 %v23, 7
    %v25 = vsub.s32 0, %v24
    %v26 = vrot.slane %v21, %v25
    %v27 = vlaneseq
    %v28 = vshrl.u32 %v27, 7
    %v29 = vsub.s32 1, %v28
    %v30 = vrot.slane %v21, %v29
    %v31 = vcombine.low %v26, %v30
    %v33 = vunpack.c.l.s4 1983009808
    %v34 = vunpack.c.0.s8 %v33
    %v35 = vlaneseq
    %v36 = vshrl.u32 %v35, 7
    %v37 = vsub.s32 %v34, %v36
    %v38 = vrot.slane %v31, %v37
    %40 = vst [vmem:[#allocation5] sm:$0xf] %v38
    // Predicated region
    $region10: #{tpu_custom_call.1} parent=1 // pred_check
      _
    $region11: #{tpu_custom_call.1} parent=1 // pred_check_branch
      %42 = sbr.rel (0) target = $region13
    $region12: #{tpu_custom_call.1} parent=1 // pred_region
      %s44 = ssub.s32 64, 64
      %45 = vsyncadd [#allocation4], %s44
      %s47 = sshll.u32 [#allocation5], 4
      %s48 = int_to_ptr.vmem [resolvable:$true] %s47
      %50 = dma.vmem_to_hbm [thread:$0]  %s48, 64, %s1, [#allocation4]
    $region13: #{tpu_custom_call.1} parent=1 // pred_fallthru
      _
    // Predicated region
    $region14: #{tpu_custom_call.1} parent=1 // pred_check
      _
    $region15: #{tpu_custom_call.1} parent=1 // pred_check_branch
      %52 = sbr.rel (0) target = $region17
    $region16: #{tpu_custom_call.1} parent=1 // pred_region
      %53 = dma.done [#allocation4], 64
    $region17: #{tpu_custom_call.1} parent=1 // pred_fallthru
      _
    %54 = vsyncpa [#allocation3], 1
    %55 = vsyncpa [#allocation4], 1

</llo_original>
